<compile_context>
chip_gen: v6e
topology: v6e:2x2x1
jax: 0.10.0
libtpu: 0.0.40
codegen_flags: <defaults>
</compile_context>

<pallas_src>
import functools

import jax
import jax.numpy as jnp
import numpy as np
from jax import lax
from jax.experimental import pallas as pl
from jax.experimental.pallas import tpu as pltpu


def _resblock_kernel(x_ref, w1s_ref, b1s_ref, w2_ref, b2_ref, w3_ref, b3_ref,
                     mask_ref, o_ref, *, W, cmid, equal):
    """Lane-dense ResBlock forward.

    Activations are (C, L): channels on sublanes, lane axis L = (images in this
    grid step) * H * W, images concatenated along lanes.  BN scale is already
    folded into the weights; only per-channel bias + ReLU remain elementwise.
    """
    x = x_ref[0]                                   # (Cin, L) bf16
    L = x.shape[-1]

    # ---- fused [conv1x1 -> BN -> ReLU] + [shortcut conv1x1 -> BN -> ReLU] ----
    # w1s stacks (scale-folded) w1 on top of ws; one MXU matmul feeds both.
    y1 = jnp.dot(w1s_ref[...], x, preferred_element_type=jnp.float32)
    y1 = jnp.maximum(y1 + b1s_ref[...], 0.0)       # (Cmid[+Cout], L) f32
    h1 = y1[:cmid]                                  # (Cmid, L) f32
    if equal:
        # Identity shortcut. TODO(synk): taken from the bf16-cast input, so the
        # residual add is bf16-quantized relative to an f32 reference.
        sc = x.astype(jnp.float32)
    else:
        sc = y1[cmid:]                              # (Cout, L) f32

    # ---- conv3x3 (ch_mid -> ch_mid, stride=1, pad=1) -------------------------
    # Nine taps = lane-shifted copies of h1, zeroed at image borders by the
    # precomputed multiplicative masks, stacked on the contraction axis and fed
    # to a single wide MXU matmul: (Cmid, 9*Cmid) @ (9*Cmid, L) -> (Cmid, L).
    taps = []
    mi = 0
    for dy in (-1, 0, 1):
        for dx in (-1, 0, 1):
            off = dy * W + dx
            if off == 0:
                taps.append(h1)
            else:
                shifted = pltpu.roll(h1, shift=(-off) % L, axis=1)
                taps.append(shifted * mask_ref[mi:mi + 1, :])
                mi += 1
    stacked = jnp.concatenate(taps, axis=0).astype(jnp.bfloat16)   # (9*Cmid, L)

    h2 = jnp.dot(w2_ref[...], stacked, preferred_element_type=jnp.float32)
    h2 = jnp.maximum(h2 + b2_ref[...], 0.0)        # (Cmid, L) f32

    # ---- conv1x1 (ch_mid -> ch_out) + bias + ReLU ----------------------------
    h3 = jnp.dot(w3_ref[...], h2.astype(jnp.bfloat16),
                 preferred_element_type=jnp.float32)
    h3 = jnp.maximum(h3 + b3_ref[...], 0.0)        # (Cout, L) f32

    # ---- residual add (f32) then bf16 store ----------------------------------
    o_ref[0] = (h3 + sc).astype(o_ref.dtype)


def _build_tap_masks(H, W, group):
    """(8, group*H*W) f32 border masks for the 8 non-center 3x3 taps, ordered to
    match the kernel's (dy, dx) loop (center skipped).  Per-image positions are
    tiled `group` times so cross-image roll spillover is zeroed too."""
    HW = H * W
    p = np.arange(HW)
    hh, ww = p // W, p % W
    rows = []
    for dy in (-1, 0, 1):
        for dx in (-1, 0, 1):
            if dy == 0 and dx == 0:
                continue
            ok = ((hh + dy >= 0) & (hh + dy < H) &
                  (ww + dx >= 0) & (ww + dx < W))
            rows.append(ok.astype(np.float32))
    m = np.stack(rows, axis=0)                      # (8, HW)
    return jnp.asarray(np.tile(m, (1, group)))      # (8, group*HW)


def _num_grid_steps(n_images):
    """One lane-concatenated grid step on single-TC chips (v5e/v6e); keep two
    'parallel' steps on dual-TensorCore v7x so both cores stay busy."""
    try:
        kind = jax.devices()[0].device_kind.lower()
    except Exception:
        kind = ""
    if ("v7" in kind or "tpu7" in kind) and n_images >= 2 and n_images % 2 == 0:
        return 2
    return 1


def resblock_forward(x_nchw, kparams, *, num_steps=None):
    """x_nchw: (N, C_in, H, W) float32 (PyTorch NCHW convention).
    kparams: kernel-layout params from pack_params().  Returns (N, C_out, H, W)
    in bfloat16 (accumulation and the residual add are f32)."""
    N, Cin, H, W = x_nchw.shape
    HW = H * W
    Cmid = kparams["w2"].shape[0]
    Cout = kparams["w3"].shape[0]
    equal = kparams["equal"]

    if num_steps is None:
        num_steps = _num_grid_steps(N)
    if N % num_steps != 0:
        num_steps = 1
    G = N // num_steps
    L = G * HW

    # (N, Cin, H, W) -> (steps, Cin, G*HW): G images lane-concatenated per step.
    x_flat = (x_nchw.reshape(num_steps, G, Cin, HW)
              .transpose(0, 2, 1, 3)
              .reshape(num_steps, Cin, L)
              .astype(jnp.bfloat16))
    masks = _build_tap_masks(H, W, G)

    kernel = functools.partial(_resblock_kernel, W=W, cmid=Cmid, equal=equal)

    def const_spec(arr):
        nd = arr.ndim
        return pl.BlockSpec(arr.shape, lambda n, _nd=nd: (0,) * _nd)

    consts = [kparams["w1s"], kparams["b1s"], kparams["w2"], kparams["b2"],
              kparams["w3"], kparams["b3"], masks]
    args = [x_flat] + consts
    in_specs = ([pl.BlockSpec((1, Cin, L), lambda n: (n, 0, 0))]
                + [const_spec(a) for a in consts])

    flops = 2 * N * HW * (Cin * (Cmid + (0 if equal else Cout))
                          + 9 * Cmid * Cmid + Cmid * Cout)
    bytes_accessed = int(x_flat.size) * 2 + N * Cout * HW * 2
    for a in consts:
        bytes_accessed += int(np.prod(a.shape)) * int(a.dtype.itemsize)
    cost = pl.CostEstimate(flops=flops, transcendentals=0,
                           bytes_accessed=int(bytes_accessed))

    out_flat = pl.pallas_call(
        kernel,
        out_shape=jax.ShapeDtypeStruct((num_steps, Cout, L), jnp.bfloat16),
        grid_spec=pltpu.PrefetchScalarGridSpec(
            num_scalar_prefetch=0,
            grid=(num_steps,),
            in_specs=in_specs,
            out_specs=pl.BlockSpec((1, Cout, L), lambda n: (n, 0, 0)),
        ),
        compiler_params=pltpu.CompilerParams(
            dimension_semantics=("parallel",),
            vmem_limit_bytes=32 * 1024 * 1024),
        cost_estimate=cost,
    )(*args)

    # (steps, Cout, G*HW) -> (N, Cout, H, W); kept in bf16 (halves writeback).
    out = (out_flat.reshape(num_steps, Cout, G, HW)
           .transpose(0, 2, 1, 3)
           .reshape(N, Cout, H, W))
    return out


def init_params(key, ch_in, ch_mid, ch_out, eps=1e-5):
    """Deterministic synthetic Conv (OIHW) + BatchNorm params, BN folded to
    per-channel scale/bias (eval mode), all f32 (reference layout)."""
    keys = iter(jax.random.split(key, 24))

    def conv_bn(cin, cout, k):
        w = 0.1 * jax.random.normal(next(keys), (cout, cin, k, k), jnp.float32)
        conv_b = 0.1 * jax.random.normal(next(keys), (cout,), jnp.float32)
        gamma = 1.0 + 0.1 * jax.random.normal(next(keys), (cout,), jnp.float32)
        beta = 0.1 * jax.random.normal(next(keys), (cout,), jnp.float32)
        mean = 0.1 * jax.random.normal(next(keys), (cout,), jnp.float32)
        var = jnp.abs(jax.random.normal(next(keys), (cout,), jnp.float32)) + 0.5
        scale = gamma / jnp.sqrt(var + eps)
        bias = beta + (conv_b - mean) * scale
        return w, scale, bias

    p = {}
    p["w1"], p["s1"], p["b1"] = conv_bn(ch_in, ch_mid, 1)    # conv1x1
    p["w2"], p["s2"], p["b2"] = conv_bn(ch_mid, ch_mid, 3)   # conv3x3
    p["w3"], p["s3"], p["b3"] = conv_bn(ch_mid, ch_out, 1)   # conv1x1
    p["ws"], p["ss"], p["bs"] = conv_bn(ch_in, ch_out, 1)    # make_equal_channel
    return p


def pack_params(p):
    """Pack reference (OIHW, f32) params into the kernel layout: BN scale folded
    into bf16 weight matrices (output channels first), f32 (C,1) biases; the
    first conv and the shortcut conv are row-stacked into one fused matrix."""
    Cin = p["w1"].shape[1]
    Cout = p["w3"].shape[0]
    equal = (Cin == Cout)

    def fold1x1(w, s):                                  # (O,I,1,1),(O,) -> (O,I)
        return w[:, :, 0, 0] * s[:, None]

    kp = {"equal": equal}
    w1 = fold1x1(p["w1"], p["s1"])                       # (Cmid, Cin)
    if equal:
        kp["w1s"] = w1.astype(jnp.bfloat16)
        kp["b1s"] = p["b1"].reshape(-1, 1).astype(jnp.float32)
    else:
        ws = fold1x1(p["ws"], p["ss"])                   # (Cout, Cin)
        kp["w1s"] = jnp.concatenate([w1, ws], axis=0).astype(jnp.bfloat16)
        kp["b1s"] = jnp.concatenate([p["b1"], p["bs"]],
                                    axis=0).reshape(-1, 1).astype(jnp.float32)
    # (O, I, kh, kw) -> (O, kh, kw, I) -> (O, 9*I); tap order matches the kernel.
    w2 = jnp.transpose(p["w2"], (0, 2, 3, 1)).reshape(p["w2"].shape[0], -1)
    kp["w2"] = (w2 * p["s2"][:, None]).astype(jnp.bfloat16)
    kp["b2"] = p["b2"].reshape(-1, 1).astype(jnp.float32)
    kp["w3"] = fold1x1(p["w3"], p["s3"]).astype(jnp.bfloat16)
    kp["b3"] = p["b3"].reshape(-1, 1).astype(jnp.float32)
    return kp


def resblock_reference(x_nchw, p):
    """Pure-JAX f32 reference using lax.conv_general_dilated (NCHW / OIHW)."""
    def conv_bn_relu(h, w, s, b, pad):
        y = lax.conv_general_dilated(
            h, w, (1, 1), pad, dimension_numbers=("NCHW", "OIHW", "NCHW"))
        y = y * s.reshape(1, -1, 1, 1) + b.reshape(1, -1, 1, 1)
        return jnp.maximum(y, 0.0)

    out = conv_bn_relu(x_nchw, p["w1"], p["s1"], p["b1"], "VALID")
    out = conv_bn_relu(out, p["w2"], p["s2"], p["b2"], "SAME")
    out = conv_bn_relu(out, p["w3"], p["s3"], p["b3"], "VALID")
    if out.shape[1] != x_nchw.shape[1]:
        sc = conv_bn_relu(x_nchw, p["ws"], p["ss"], p["bs"], "VALID")
    else:
        sc = x_nchw
    return out + sc


if __name__ == "__main__":
    key = jax.random.PRNGKey(0)
    kx, kp = jax.random.split(key)

    N, Cin, Cmid, Cout, H, W = 2, 4, 8, 16, 16, 16
    x = jax.random.normal(kx, (N, Cin, H, W), jnp.float32)
    params = init_params(kp, Cin, Cmid, Cout)
    kparams = pack_params(params)

    out = resblock_forward(x, kparams)
    out = jax.block_until_ready(out)

    ref = resblock_reference(x, params)
    assert out.shape == (N, Cout, H, W), out.shape

    out_f32 = np.asarray(out.astype(jnp.float32))
    ref_np = np.asarray(ref)
    max_err = float(np.max(np.abs(out_f32 - ref_np)))
    assert np.allclose(out_f32, ref_np, rtol=4e-2, atol=4e-2), max_err

    print("KERNEL_OK")
</pallas_src>

<mosaic_0001>
module attributes {stable_mosaic.version = 11 : i64} {
  func.func @_resblock_kernel(%arg0: i32, %arg1: memref<1x4x512xbf16, #tpu.memory_space<vmem>>, %arg2: memref<24x4xbf16, #tpu.memory_space<vmem>>, %arg3: memref<24x1xf32, #tpu.memory_space<vmem>>, %arg4: memref<8x72xbf16, #tpu.memory_space<vmem>>, %arg5: memref<8x1xf32, #tpu.memory_space<vmem>>, %arg6: memref<16x8xbf16, #tpu.memory_space<vmem>>, %arg7: memref<16x1xf32, #tpu.memory_space<vmem>>, %arg8: memref<8x512xf32, #tpu.memory_space<vmem>>, %arg9: memref<1x16x512xbf16, #tpu.memory_space<vmem>>) attributes {dimension_semantics = [#tpu.dimension_semantics<parallel>], iteration_bounds = array<i64: 1>, scalar_prefetch = 0 : i64, scratch_operands = 0 : i64, tpu.core_type = #tpu.core_type<tc>, window_params = [{transform_indices = @transform_0, window_bounds = array<i64: 1, 4, 512>}, {pipeline_mode = #tpu.pipeline_mode<synchronous>, transform_indices = @transform_1, window_bounds = array<i64: 24, 4>}, {pipeline_mode = #tpu.pipeline_mode<synchronous>, transform_indices = @transform_2, window_bounds = array<i64: 24, 1>}, {pipeline_mode = #tpu.pipeline_mode<synchronous>, transform_indices = @transform_3, window_bounds = array<i64: 8, 72>}, {pipeline_mode = #tpu.pipeline_mode<synchronous>, transform_indices = @transform_4, window_bounds = array<i64: 8, 1>}, {pipeline_mode = #tpu.pipeline_mode<synchronous>, transform_indices = @transform_5, window_bounds = array<i64: 16, 8>}, {pipeline_mode = #tpu.pipeline_mode<synchronous>, transform_indices = @transform_6, window_bounds = array<i64: 16, 1>}, {pipeline_mode = #tpu.pipeline_mode<synchronous>, transform_indices = @transform_7, window_bounds = array<i64: 8, 512>}, {transform_indices = @transform_8, window_bounds = array<i64: 1, 16, 512>}]} {
    %c0 = arith.constant 0 : index
    %c0_0 = arith.constant 0 : index
    %c0_1 = arith.constant 0 : index
    %0 = vector.load %arg1[%c0, %c0_0, %c0_1] : memref<1x4x512xbf16, #tpu.memory_space<vmem>>, vector<1x4x512xbf16>
    %1 = vector.shape_cast %0 : vector<1x4x512xbf16> to vector<4x512xbf16>
    %c0_2 = arith.constant 0 : index
    %c0_3 = arith.constant 0 : index
    %2 = vector.load %arg2[%c0_2, %c0_3] : memref<24x4xbf16, #tpu.memory_space<vmem>>, vector<24x4xbf16>
    %cst = arith.constant dense<0.000000e+00> : vector<24x512xf32>
    %3 = tpu.matmul %2, %1, %cst {dimension_numbers = #tpu.dot_dimension_numbers<[1], [0], [0], [1], [0, 0, 1, 1], [], []>} : vector<24x4xbf16>, vector<4x512xbf16>, vector<24x512xf32> -> vector<24x512xf32>
    %c0_4 = arith.constant 0 : index
    %c0_5 = arith.constant 0 : index
    %4 = vector.load %arg3[%c0_4, %c0_5] : memref<24x1xf32, #tpu.memory_space<vmem>>, vector<24x1xf32>
    %5 = vector.broadcast %4 : vector<24x1xf32> to vector<24x512xf32>
    %6 = arith.addf %3, %5 : vector<24x512xf32>
    %cst_6 = arith.constant 0.000000e+00 : f32
    %7 = vector.broadcast %cst_6 : f32 to vector<24x512xf32>
    %8 = arith.maximumf %6, %7 : vector<24x512xf32>
    %9 = vector.extract_strided_slice %8 {offsets = [0, 0], sizes = [8, 512], strides = [1, 1]} : vector<24x512xf32> to vector<8x512xf32>
    %10 = vector.extract_strided_slice %8 {offsets = [8, 0], sizes = [16, 512], strides = [1, 1]} : vector<24x512xf32> to vector<16x512xf32>
    %c17_i32 = arith.constant 17 : i32
    %11 = tpu.dynamic_rotate %9 by %c17_i32 dim 1 : vector<8x512xf32>, i32 -> vector<8x512xf32>
    %c0_7 = arith.constant 0 : index
    %c0_8 = arith.constant 0 : index
    %12 = vector.load %arg8[%c0_7, %c0_8] : memref<8x512xf32, #tpu.memory_space<vmem>>, vector<1x512xf32>
    %13 = vector.broadcast %12 : vector<1x512xf32> to vector<8x512xf32>
    %14 = arith.mulf %11, %13 : vector<8x512xf32>
    %c16_i32 = arith.constant 16 : i32
    %15 = tpu.dynamic_rotate %9 by %c16_i32 dim 1 : vector<8x512xf32>, i32 -> vector<8x512xf32>
    %c1 = arith.constant 1 : index
    %c0_9 = arith.constant 0 : index
    %16 = vector.load %arg8[%c1, %c0_9] : memref<8x512xf32, #tpu.memory_space<vmem>>, vector<1x512xf32>
    %17 = vector.broadcast %16 : vector<1x512xf32> to vector<8x512xf32>
    %18 = arith.mulf %15, %17 : vector<8x512xf32>
    %c15_i32 = arith.constant 15 : i32
    %19 = tpu.dynamic_rotate %9 by %c15_i32 dim 1 : vector<8x512xf32>, i32 -> vector<8x512xf32>
    %c2 = arith.constant 2 : index
    %c0_10 = arith.constant 0 : index
    %20 = vector.load %arg8[%c2, %c0_10] : memref<8x512xf32, #tpu.memory_space<vmem>>, vector<1x512xf32>
    %21 = vector.broadcast %20 : vector<1x512xf32> to vector<8x512xf32>
    %22 = arith.mulf %19, %21 : vector<8x512xf32>
    %c1_i32 = arith.constant 1 : i32
    %23 = tpu.dynamic_rotate %9 by %c1_i32 dim 1 : vector<8x512xf32>, i32 -> vector<8x512xf32>
    %c3 = arith.constant 3 : index
    %c0_11 = arith.constant 0 : index
    %24 = vector.load %arg8[%c3, %c0_11] : memref<8x512xf32, #tpu.memory_space<vmem>>, vector<1x512xf32>
    %25 = vector.broadcast %24 : vector<1x512xf32> to vector<8x512xf32>
    %26 = arith.mulf %23, %25 : vector<8x512xf32>
    %c511_i32 = arith.constant 511 : i32
    %27 = tpu.dynamic_rotate %9 by %c511_i32 dim 1 : vector<8x512xf32>, i32 -> vector<8x512xf32>
    %c4 = arith.constant 4 : index
    %c0_12 = arith.constant 0 : index
    %28 = vector.load %arg8[%c4, %c0_12] : memref<8x512xf32, #tpu.memory_space<vmem>>, vector<1x512xf32>
    %29 = vector.broadcast %28 : vector<1x512xf32> to vector<8x512xf32>
    %30 = arith.mulf %27, %29 : vector<8x512xf32>
    %c497_i32 = arith.constant 497 : i32
    %31 = tpu.dynamic_rotate %9 by %c497_i32 dim 1 : vector<8x512xf32>, i32 -> vector<8x512xf32>
    %c5 = arith.constant 5 : index
    %c0_13 = arith.constant 0 : index
    %32 = vector.load %arg8[%c5, %c0_13] : memref<8x512xf32, #tpu.memory_space<vmem>>, vector<1x512xf32>
    %33 = vector.broadcast %32 : vector<1x512xf32> to vector<8x512xf32>
    %34 = arith.mulf %31, %33 : vector<8x512xf32>
    %c496_i32 = arith.constant 496 : i32
    %35 = tpu.dynamic_rotate %9 by %c496_i32 dim 1 : vector<8x512xf32>, i32 -> vector<8x512xf32>
    %c6 = arith.constant 6 : index
    %c0_14 = arith.constant 0 : index
    %36 = vector.load %arg8[%c6, %c0_14] : memref<8x512xf32, #tpu.memory_space<vmem>>, vector<1x512xf32>
    %37 = vector.broadcast %36 : vector<1x512xf32> to vector<8x512xf32>
    %38 = arith.mulf %35, %37 : vector<8x512xf32>
    %c495_i32 = arith.constant 495 : i32
    %39 = tpu.dynamic_rotate %9 by %c495_i32 dim 1 : vector<8x512xf32>, i32 -> vector<8x512xf32>
    %c7 = arith.constant 7 : index
    %c0_15 = arith.constant 0 : index
    %40 = vector.load %arg8[%c7, %c0_15] : memref<8x512xf32, #tpu.memory_space<vmem>>, vector<1x512xf32>
    %41 = vector.broadcast %40 : vector<1x512xf32> to vector<8x512xf32>
    %42 = arith.mulf %39, %41 : vector<8x512xf32>
    %43 = tpu.concatenate %14, %18, %22, %26, %9, %30, %34, %38, %42 in 0 : vector<8x512xf32>, vector<8x512xf32>, vector<8x512xf32>, vector<8x512xf32>, vector<8x512xf32>, vector<8x512xf32>, vector<8x512xf32>, vector<8x512xf32>, vector<8x512xf32> -> vector<72x512xf32>
    %44 = arith.truncf %43 : vector<72x512xf32> to vector<72x512xbf16>
    %c0_16 = arith.constant 0 : index
    %c0_17 = arith.constant 0 : index
    %45 = vector.load %arg4[%c0_16, %c0_17] : memref<8x72xbf16, #tpu.memory_space<vmem>>, vector<8x72xbf16>
    %cst_18 = arith.constant dense<0.000000e+00> : vector<8x512xf32>
    %46 = tpu.matmul %45, %44, %cst_18 {dimension_numbers = #tpu.dot_dimension_numbers<[1], [0], [0], [1], [0, 0, 1, 1], [], []>} : vector<8x72xbf16>, vector<72x512xbf16>, vector<8x512xf32> -> vector<8x512xf32>
    %c0_19 = arith.constant 0 : index
    %c0_20 = arith.constant 0 : index
    %47 = vector.load %arg5[%c0_19, %c0_20] : memref<8x1xf32, #tpu.memory_space<vmem>>, vector<8x1xf32>
    %48 = vector.broadcast %47 : vector<8x1xf32> to vector<8x512xf32>
    %49 = arith.addf %46, %48 : vector<8x512xf32>
    %cst_21 = arith.constant 0.000000e+00 : f32
    %50 = vector.broadcast %cst_21 : f32 to vector<8x512xf32>
    %51 = arith.maximumf %49, %50 : vector<8x512xf32>
    %c0_22 = arith.constant 0 : index
    %c0_23 = arith.constant 0 : index
    %52 = vector.load %arg6[%c0_22, %c0_23] : memref<16x8xbf16, #tpu.memory_space<vmem>>, vector<16x8xbf16>
    %53 = arith.truncf %51 : vector<8x512xf32> to vector<8x512xbf16>
    %cst_24 = arith.constant dense<0.000000e+00> : vector<16x512xf32>
    %54 = tpu.matmul %52, %53, %cst_24 {dimension_numbers = #tpu.dot_dimension_numbers<[1], [0], [0], [1], [0, 0, 1, 1], [], []>} : vector<16x8xbf16>, vector<8x512xbf16>, vector<16x512xf32> -> vector<16x512xf32>
    %c0_25 = arith.constant 0 : index
    %c0_26 = arith.constant 0 : index
    %55 = vector.load %arg7[%c0_25, %c0_26] : memref<16x1xf32, #tpu.memory_space<vmem>>, vector<16x1xf32>
    %56 = vector.broadcast %55 : vector<16x1xf32> to vector<16x512xf32>
    %57 = arith.addf %54, %56 : vector<16x512xf32>
    %cst_27 = arith.constant 0.000000e+00 : f32
    %58 = vector.broadcast %cst_27 : f32 to vector<16x512xf32>
    %59 = arith.maximumf %57, %58 : vector<16x512xf32>
    %60 = arith.addf %59, %10 : vector<16x512xf32>
    %61 = arith.truncf %60 : vector<16x512xf32> to vector<16x512xbf16>
    %c0_28 = arith.constant 0 : index
    %c0_29 = arith.constant 0 : index
    %c0_30 = arith.constant 0 : index
    %62 = vector.load %arg9[%c0_28, %c0_29, %c0_30] : memref<1x16x512xbf16, #tpu.memory_space<vmem>>, vector<1x16x512xbf16>
    %63 = vector.shape_cast %62 : vector<1x16x512xbf16> to vector<16x512xbf16>
    %64 = vector.shape_cast %61 : vector<16x512xbf16> to vector<1x16x512xbf16>
    tpu.vector_store %arg9[%c0_28, %c0_29, %c0_30], %64 {strides = array<i32>} : memref<1x16x512xbf16, #tpu.memory_space<vmem>>, vector<1x16x512xbf16>,
    return
  }
  func.func @transform_0(%arg0: i32) -> (i32, i32, i32) {
    %c0_i32 = arith.constant 0 : i32
    %c0_i32_0 = arith.constant 0 : i32
    %c0_i32_1 = arith.constant 0 : i32
    return %arg0, %c0_i32, %c0_i32_0 : i32, i32, i32
  }
  func.func @transform_1(%arg0: i32) -> (i32, i32) {
    %c0_i32 = arith.constant 0 : i32
    %c0_i32_0 = arith.constant 0 : i32
    %c0_i32_1 = arith.constant 0 : i32
    return %c0_i32, %c0_i32_0 : i32, i32
  }
  func.func @transform_2(%arg0: i32) -> (i32, i32) {
    %c0_i32 = arith.constant 0 : i32
    %c0_i32_0 = arith.constant 0 : i32
    %c0_i32_1 = arith.constant 0 : i32
    return %c0_i32, %c0_i32_0 : i32, i32
  }
  func.func @transform_3(%arg0: i32) -> (i32, i32) {
    %c0_i32 = arith.constant 0 : i32
    %c0_i32_0 = arith.constant 0 : i32
    %c0_i32_1 = arith.constant 0 : i32
    return %c0_i32, %c0_i32_0 : i32, i32
  }
  func.func @transform_4(%arg0: i32) -> (i32, i32) {
    %c0_i32 = arith.constant 0 : i32
    %c0_i32_0 = arith.constant 0 : i32
    %c0_i32_1 = arith.constant 0 : i32
    return %c0_i32, %c0_i32_0 : i32, i32
  }
  func.func @transform_5(%arg0: i32) -> (i32, i32) {
    %c0_i32 = arith.constant 0 : i32
    %c0_i32_0 = arith.constant 0 : i32
    %c0_i32_1 = arith.constant 0 : i32
    return %c0_i32, %c0_i32_0 : i32, i32
  }
  func.func @transform_6(%arg0: i32) -> (i32, i32) {
    %c0_i32 = arith.constant 0 : i32
    %c0_i32_0 = arith.constant 0 : i32
    %c0_i32_1 = arith.constant 0 : i32
    return %c0_i32, %c0_i32_0 : i32, i32
  }
  func.func @transform_7(%arg0: i32) -> (i32, i32) {
    %c0_i32 = arith.constant 0 : i32
    %c0_i32_0 = arith.constant 0 : i32
    %c0_i32_1 = arith.constant 0 : i32
    return %c0_i32, %c0_i32_0 : i32, i32
  }
  func.func @transform_8(%arg0: i32) -> (i32, i32, i32) {
    %c0_i32 = arith.constant 0 : i32
    %c0_i32_0 = arith.constant 0 : i32
    %c0_i32_1 = arith.constant 0 : i32
    return %arg0, %c0_i32, %c0_i32_0 : i32, i32, i32
  }
}

</mosaic_0001>

<llo_original>
// kernel: tpu_custom_call.1
$region0: #{tpu_custom_call.1}
  #allocation0 [shape = 'u32[]', space=smem, size = 0x4, offset = 0x4, fixed_abs, tag = 'smem constant byte address 0x4 - core index']
  #allocation1 [shape = 'u32[144,128]{1,0:T(1,128)}', space=vmem, size = 0x12000, scoped, tag = 'internal scratch']
  %s0 = inlined_call_operand.vmem [shape: bf16[1,4,512], index: 0, kind: input, shape index: {}]
  %s1 = inlined_call_operand.vmem [shape: bf16[24,4], index: 1, kind: input, shape index: {}]
  %s2 = inlined_call_operand.vmem [shape: f32[24,1], index: 2, kind: input, shape index: {}]
  %s3 = inlined_call_operand.vmem [shape: bf16[8,72], index: 3, kind: input, shape index: {}]
  %s4 = inlined_call_operand.vmem [shape: f32[8,1], index: 4, kind: input, shape index: {}]
  %s5 = inlined_call_operand.vmem [shape: bf16[16,8], index: 5, kind: input, shape index: {}]
  %s6 = inlined_call_operand.vmem [shape: f32[16,1], index: 6, kind: input, shape index: {}]
  %s7 = inlined_call_operand.vmem [shape: f32[8,512], index: 7, kind: input, shape index: {}]
  %s8 = inlined_call_operand.hbm [shape: bf16[1,16,512], index: 8, kind: output, shape index: {}]
  %s9 = sld [smem:[#allocation0]]
  $region42: #{tpu_custom_call.1} parent=0
    _
  %s11 = ssub.s32 1, %s9
  %s12 = scalar_select 0, %s11, %s9
  $region1: #{tpu_custom_call.1} parent=0
    #allocation2 [shape = 'u8[16384]{0}', space=vmem, size = 0x4000, scoped, tag = 'output window, operand 0, single buffered']
    #allocation3 [shape = 's32[1]{0}', space=sflag, size = 0x4, scoped, tag = 'scoped memory for tpu_custom_call.1']
    %13 = vsyncpa [#allocation3], 0
    // Predicated region
    $region2: #{tpu_custom_call.1} parent=1 // pred_check
      _
    $region3: #{tpu_custom_call.1} parent=1 // pred_check_branch
      %15 = sbr.rel (0) target = $region5
    $region4: #{tpu_custom_call.1} parent=1 // pred_region
      _
    $region5: #{tpu_custom_call.1} parent=1 // pred_fallthru
      _
    // Predicated region
    $region6: #{tpu_custom_call.1} parent=1 // pred_check
      _
    $region7: #{tpu_custom_call.1} parent=1 // pred_check_branch
      %17 = sbr.rel (0) target = $region9
    $region8: #{tpu_custom_call.1} parent=1 // pred_region
      _
    $region9: #{tpu_custom_call.1} parent=1 // pred_fallthru
      _
    // Predicated region
    $region10: #{tpu_custom_call.1} parent=1 // pred_check
      _
    $region11: #{tpu_custom_call.1} parent=1 // pred_check_branch
      %19 = sbr.rel (0) target = $region13
    $region12: #{tpu_custom_call.1} parent=1 // pred_region
      _
    $region13: #{tpu_custom_call.1} parent=1 // pred_fallthru
      _
    // Predicated region
    $region14: #{tpu_custom_call.1} parent=1 // pred_check
      _
    $region15: #{tpu_custom_call.1} parent=1 // pred_check_branch
      %21 = sbr.rel (0) target = $region17
    $region16: #{tpu_custom_call.1} parent=1 // pred_region
      _
    $region17: #{tpu_custom_call.1} parent=1 // pred_fallthru
      _
    // Predicated region
    $region18: #{tpu_custom_call.1} parent=1 // pred_check
      _
    $region19: #{tpu_custom_call.1} parent=1 // pred_check_branch
      %23 = sbr.rel (0) target = $region21
    $region20: #{tpu_custom_call.1} parent=1 // pred_region
      _
    $region21: #{tpu_custom_call.1} parent=1 // pred_fallthru
      _
    // Predicated region
    $region22: #{tpu_custom_call.1} parent=1 // pred_check
      _
    $region23: #{tpu_custom_call.1} parent=1 // pred_check_branch
      %25 = sbr.rel (0) target = $region25
    $region24: #{tpu_custom_call.1} parent=1 // pred_region
      _
    $region25: #{tpu_custom_call.1} parent=1 // pred_fallthru
      _
    // Predicated region
    $region26: #{tpu_custom_call.1} parent=1 // pred_check
      _
    $region27: #{tpu_custom_call.1} parent=1 // pred_check_branch
      %27 = sbr.rel (0) target = $region29
    $region28: #{tpu_custom_call.1} parent=1 // pred_region
      _
    $region29: #{tpu_custom_call.1} parent=1 // pred_fallthru
      _
    // Predicated region
    $region30: #{tpu_custom_call.1} parent=1 // pred_check
      _
    $region31: #{tpu_custom_call.1} parent=1 // pred_check_branch
      %29 = sbr.rel (0) target = $region33
    $region32: #{tpu_custom_call.1} parent=1 // pred_region
      _
    $region33: #{tpu_custom_call.1} parent=1 // pred_fallthru
      _
    %v31 = vld [vmem:[%s0] sm:$0xff]
    %v32 = vld [vmem:[%s1] sm:$0xf]
    %v33 = vld [vmem:[%s1 + $0x4] sm:$0xf]
    %v34 = vld [vmem:[%s1 + $0x8] sm:$0xf]
    %v35 = vld [vmem:[%s2] sm:$0xff]
    %v36 = vld [vmem:[%s2 + $0x8] sm:$0xff]
    %v37 = vld [vmem:[%s2 + $0x10] sm:$0xff]
    %39 = vset.pattern.permute.xlu0 0
    %40 = vperm.xlu0 %39, %v35
    %v41 = vpop.permute.xlu0 %40
    %44 = vset.pattern.permute.xlu0 0
    %45 = vperm.xlu0 %44, %v36
    %v46 = vpop.permute.xlu0 %45
    %49 = vset.pattern.permute.xlu0 0
    %50 = vperm.xlu0 %49, %v37
    %v51 = vpop.permute.xlu0 %50
    %v56 = vunpack.c.l.b16 %v32
    %v57 = vunpack.c.l.b16 %v33
    %v58 = vunpack.c.l.b16 %v34
    %v59 = vpack.c.b16 %v57, %v56
    %v60 = vpack.c.b16 %v58, %v58
    %v62 = vcombine.high %v31, %v31
    %v64 = vunpack.c.l.s4 1983009808
    %v65 = vunpack.c.0.s8 %v64
    %v66 = vlaneseq
    %v67 = vshrl.u32 %v66, 7
    %v68 = vsub.s32 %v65, %v67
    %v69 = vrot.slane %v31, %v68
    %v71 = vunpack.c.l.s4 1983009808
    %v72 = vunpack.c.0.s8 %v71
    %v73 = vlaneseq
    %v74 = vshrl.u32 %v73, 7
    %v75 = vsub.s32 %v72, %v74
    %v76 = vrot.slane %v62, %v75
    %v77 = vcombine.high %v69, %v69
    %v78 = vcombine.high %v76, %v76
    %vm79 = vcmask 31744
    %v81 = vsel %vm79, %v59, 0
    %v84 = vsel %vm79, %v60, 0
    %vm86 = vcmask 1041408
    %v88 = vsel %vm86, %v69, 0
    %v91 = vsel %vm86, %v77, 0
    %v94 = vsel %vm86, %v76, 0
    %v97 = vsel %vm86, %v78, 0
    %99 = vmatprep.subr.bf16.mxu0 0
    %100 = vmatpush1.bf16.msra.mxu0 0
    %101 = vmatprep.subr.bf16.mxu0 0
    %102 = vmatpush1.bf16.msra.mxu0 0
    %103 = vmatprep.subr.bf16.mxu0 0
    %104 = vmatpush1.bf16.msra.mxu0 0
    %105 = vmatprep.subr.bf16.mxu0 0
    %106 = vmatpush1.bf16.msra.mxu0 0
    %107 = vmatprep.subr.bf16.mxu0 0
    %108 = vmatpush1.bf16.msra.mxu0 0
    %109 = vmatprep.subr.bf16.mxu0 0
    %110 = vmatpush1.bf16.msra.mxu0 0
    %111 = vmatprep.subr.bf16.mxu0 0
    %112 = vmatpush1.bf16.msra.mxu0 0
    %113 = vmatprep.subr.bf16.mxu0 %v91
    %114 = vmatpush1.bf16.msra.mxu0 %v88
    %115 = vmatprep.subr.bf16.mxu0 0
    %116 = vmatpush2.bf16.msra.mxu0 0
    %117 = vmatprep.subr.bf16.mxu0 0
    %118 = vmatpush2.bf16.msra.mxu0 0
    %119 = vmatprep.subr.bf16.mxu0 0
    %120 = vmatpush2.bf16.msra.mxu0 0
    %121 = vmatprep.subr.bf16.mxu0 0
    %122 = vmatpush2.bf16.msra.mxu0 0
    %123 = vmatprep.subr.bf16.mxu0 0
    %124 = vmatpush2.bf16.msra.mxu0 0
    %125 = vmatprep.subr.bf16.mxu0 0
    %126 = vmatpush2.bf16.msra.mxu0 0
    %127 = vmatprep.subr.bf16.mxu0 0
    %128 = vmatpush2.bf16.msra.mxu0 0
    %129 = vmatprep.subr.bf16.mxu0 0
    %130 = vmatpush2.bf16.msra.mxu0 0
    %131 = vmatprep.mubr.bf16.mxu0 0
    %132 = vmatmul.mubr.bf16.gmra.mxu0 %v81
    %v133 = vpop.f32.mrf.mxu0
    %v134 = vadd.f32 %v41, %v133
    %v135 = vpop.f32.mrf.mxu0
    %v136 = vadd.f32 %v41, %v135
    %v137 = vpop.f32.mrf.mxu0
    %v138 = vadd.f32 %v46, %v137
    %v139 = vpop.f32.mrf.mxu0
    %v140 = vadd.f32 %v46, %v139
    %141 = vmatprep.mubr.bf16.mxu0 0
    %142 = vmatmul.mubr.bf16.gmra.mxu0 %v84
    %v143 = vpop.f32.mrf.mxu0
    %v144 = vadd.f32 %v51, %v143
    %v145 = vpop.f32.mrf.mxu0
    %v146 = vadd.f32 %v51, %v145
    %v147 = vpop.f32.mrf.mxu0
    %v148 = vpop.f32.mrf.mxu0
    %149 = vdwg.mxu0
    %150 = vmatprep.subr.bf16.mxu0 0
    %151 = vmatpush1.bf16.msra.mxu0 0
    %152 = vmatprep.subr.bf16.mxu0 0
    %153 = vmatpush1.bf16.msra.mxu0 0
    %154 = vmatprep.subr.bf16.mxu0 0
    %155 = vmatpush1.bf16.msra.mxu0 0
    %156 = vmatprep.subr.bf16.mxu0 0
    %157 = vmatpush1.bf16.msra.mxu0 0
    %158 = vmatprep.subr.bf16.mxu0 0
    %159 = vmatpush1.bf16.msra.mxu0 0
    %160 = vmatprep.subr.bf16.mxu0 0
    %161 = vmatpush1.bf16.msra.mxu0 0
    %162 = vmatprep.subr.bf16.mxu0 0
    %163 = vmatpush1.bf16.msra.mxu0 0
    %164 = vmatprep.subr.bf16.mxu0 %v97
    %165 = vmatpush1.bf16.msra.mxu0 %v94
    %166 = vmatprep.subr.bf16.mxu0 0
    %167 = vmatpush2.bf16.msra.mxu0 0
    %168 = vmatprep.subr.bf16.mxu0 0
    %169 = vmatpush2.bf16.msra.mxu0 0
    %170 = vmatprep.subr.bf16.mxu0 0
    %171 = vmatpush2.bf16.msra.mxu0 0
    %172 = vmatprep.subr.bf16.mxu0 0
    %173 = vmatpush2.bf16.msra.mxu0 0
    %174 = vmatprep.subr.bf16.mxu0 0
    %175 = vmatpush2.bf16.msra.mxu0 0
    %176 = vmatprep.subr.bf16.mxu0 0
    %177 = vmatpush2.bf16.msra.mxu0 0
    %178 = vmatprep.subr.bf16.mxu0 0
    %179 = vmatpush2.bf16.msra.mxu0 0
    %180 = vmatprep.subr.bf16.mxu0 0
    %181 = vmatpush2.bf16.msra.mxu0 0
    %182 = vmatprep.mubr.bf16.mxu0 0
    %183 = vmatmul.mubr.bf16.gmra.mxu0 %v81
    %v184 = vpop.f32.mrf.mxu0
    %v185 = vadd.f32 %v41, %v184
    %v186 = vpop.f32.mrf.mxu0
    %v187 = vadd.f32 %v41, %v186
    %v188 = vpop.f32.mrf.mxu0
    %v189 = vadd.f32 %v46, %v188
    %v190 = vpop.f32.mrf.mxu0
    %v191 = vadd.f32 %v46, %v190
    %192 = vmatprep.mubr.bf16.mxu0 0
    %193 = vmatmul.mubr.bf16.gmra.mxu0 %v84
    %v194 = vpop.f32.mrf.mxu0
    %v195 = vadd.f32 %v51, %v194
    %v196 = vpop.f32.mrf.mxu0
    %v197 = vadd.f32 %v51, %v196
    %v198 = vpop.f32.mrf.mxu0
    %v199 = vpop.f32.mrf.mxu0
    %200 = vdwg.mxu0
    %v201 = vmax.f32 %v134, 0.0
    %v202 = vmax.f32 %v136, 0.0
    %v203 = vmax.f32 %v185, 0.0
    %v204 = vmax.f32 %v187, 0.0
    %v205 = vmax.f32 %v138, 0.0
    %v206 = vmax.f32 %v140, 0.0
    %v207 = vmax.f32 %v189, 0.0
    %v208 = vmax.f32 %v191, 0.0
    %v209 = vmax.f32 %v144, 0.0
    %v210 = vmax.f32 %v146, 0.0
    %v211 = vmax.f32 %v195, 0.0
    %v212 = vmax.f32 %v197, 0.0
    %213 = vrot.lane.b32.xlu0 %v201, 17
    %v214 = vpop.permute.xlu0 %213
    %215 = vrot.lane.b32.xlu0 %v202, 17
    %v216 = vpop.permute.xlu0 %215
    %217 = vrot.lane.b32.xlu0 %v203, 17
    %v218 = vpop.permute.xlu0 %217
    %219 = vrot.lane.b32.xlu0 %v204, 17
    %v220 = vpop.permute.xlu0 %219
    %v221 = vlaneseq
    %v222 = vand.u32 %v221, 127
    %vm223 = vcmp.lt.s32.totalorder %v222, 17
    %v224 = vsel %vm223, %v218, %v220
    %v225 = vsel %vm223, %v216, %v218
    %v226 = vsel %vm223, %v214, %v216
    %v227 = vsel %vm223, %v220, %v214
    %v228 = vld [vmem:[%s7] ss:$8 sm:$0xf]
    %v230 = vlaneseq
    %v231 = vshrl.u32 %v230, 7
    %v232 = vsub.s32 0, %v231
    %v233 = vrot.slane %v228, %v232
    %v234 = vlaneseq
    %v235 = vshrl.u32 %v234, 7
    %v236 = vsub.s32 1, %v235
    %v237 = vrot.slane %v228, %v236
    %v238 = vlaneseq
    %v239 = vshrl.u32 %v238, 7
    %v240 = vsub.s32 2, %v239
    %v241 = vrot.slane %v228, %v240
    %v242 = vlaneseq
    %v243 = vshrl.u32 %v242, 7
    %v244 = vsub.s32 3, %v243
    %v245 = vrot.slane %v228, %v244
    %v250 = vmul.f32 %v227, %v233
    %v251 = vmul.f32 %v226, %v237
    %v252 = vmul.f32 %v225, %v241
    %v253 = vmul.f32 %v224, %v245
    %254 = vrot.lane.b32.xlu0 %v201, 16
    %v255 = vpop.permute.xlu0 %254
    %256 = vrot.lane.b32.xlu0 %v202, 16
    %v257 = vpop.permute.xlu0 %256
    %258 = vrot.lane.b32.xlu0 %v203, 16
    %v259 = vpop.permute.xlu0 %258
    %260 = vrot.lane.b32.xlu0 %v204, 16
    %v261 = vpop.permute.xlu0 %260
    %vm262 = vcmp.lt.s32.totalorder %v222, 16
    %v263 = vsel %vm262, %v259, %v261
    %v264 = vsel %vm262, %v257, %v259
    %v265 = vsel %vm262, %v255, %v257
    %v266 = vsel %vm262, %v261, %v255
    %s267 = scalar_lea.vmem %s7, 1
    %v268 = vld [vmem:[%s267] ss:$8 sm:$0xf]
    %v270 = vlaneseq
    %v271 = vshrl.u32 %v270, 7
    %v272 = vsub.s32 0, %v271
    %v273 = vrot.slane %v268, %v272
    %v274 = vlaneseq
    %v275 = vshrl.u32 %v274, 7
    %v276 = vsub.s32 1, %v275
    %v277 = vrot.slane %v268, %v276
    %v278 = vlaneseq
    %v279 = vshrl.u32 %v278, 7
    %v280 = vsub.s32 2, %v279
    %v281 = vrot.slane %v268, %v280
    %v282 = vlaneseq
    %v283 = vshrl.u32 %v282, 7
    %v284 = vsub.s32 3, %v283
    %v285 = vrot.slane %v268, %v284
    %v290 = vmul.f32 %v266, %v273
    %v291 = vmul.f32 %v265, %v277
    %v292 = vmul.f32 %v264, %v281
    %v293 = vmul.f32 %v263, %v285
    %294 = vrot.lane.b32.xlu0 %v201, 15
    %v295 = vpop.permute.xlu0 %294
    %296 = vrot.lane.b32.xlu0 %v202, 15
    %v297 = vpop.permute.xlu0 %296
    %298 = vrot.lane.b32.xlu0 %v203, 15
    %v299 = vpop.permute.xlu0 %298
    %300 = vrot.lane.b32.xlu0 %v204, 15
    %v301 = vpop.permute.xlu0 %300
    %vm302 = vcmp.lt.s32.totalorder %v222, 15
    %v303 = vsel %vm302, %v299, %v301
    %v304 = vsel %vm302, %v297, %v299
    %v305 = vsel %vm302, %v295, %v297
    %v306 = vsel %vm302, %v301, %v295
    %s307 = scalar_lea.vmem %s7, 2
    %v308 = vld [vmem:[%s307] ss:$8 sm:$0xf]
    %v310 = vlaneseq
    %v311 = vshrl.u32 %v310, 7
    %v312 = vsub.s32 0, %v311
    %v313 = vrot.slane %v308, %v312
    %v314 = vlaneseq
    %v315 = vshrl.u32 %v314, 7
    %v316 = vsub.s32 1, %v315
    %v317 = vrot.slane %v308, %v316
    %v318 = vlaneseq
    %v319 = vshrl.u32 %v318, 7
    %v320 = vsub.s32 2, %v319
    %v321 = vrot.slane %v308, %v320
    %v322 = vlaneseq
    %v323 = vshrl.u32 %v322, 7
    %v324 = vsub.s32 3, %v323
    %v325 = vrot.slane %v308, %v324
    %v330 = vmul.f32 %v306, %v313
    %v331 = vmul.f32 %v305, %v317
    %v332 = vmul.f32 %v304, %v321
    %v333 = vmul.f32 %v303, %v325
    %334 = vrot.lane.b32.xlu0 %v201, 1
    %v335 = vpop.permute.xlu0 %334
    %336 = vrot.lane.b32.xlu0 %v202, 1
    %v337 = vpop.permute.xlu0 %336
    %338 = vrot.lane.b32.xlu0 %v203, 1
    %v339 = vpop.permute.xlu0 %338
    %340 = vrot.lane.b32.xlu0 %v204, 1
    %v341 = vpop.permute.xlu0 %340
    %vm342 = vcmp.lt.s32.totalorder %v222, 1
    %v343 = vsel %vm342, %v339, %v341
    %v344 = vsel %vm342, %v337, %v339
    %v345 = vsel %vm342, %v335, %v337
    %v346 = vsel %vm342, %v341, %v335
    %s347 = scalar_lea.vmem %s7, 3
    %v348 = vld [vmem:[%s347] ss:$8 sm:$0xf]
    %v350 = vlaneseq
    %v351 = vshrl.u32 %v350, 7
    %v352 = vsub.s32 0, %v351
    %v353 = vrot.slane %v348, %v352
    %v354 = vlaneseq
    %v355 = vshrl.u32 %v354, 7
    %v356 = vsub.s32 1, %v355
    %v357 = vrot.slane %v348, %v356
    %v358 = vlaneseq
    %v359 = vshrl.u32 %v358, 7
    %v360 = vsub.s32 2, %v359
    %v361 = vrot.slane %v348, %v360
    %v362 = vlaneseq
    %v363 = vshrl.u32 %v362, 7
    %v364 = vsub.s32 3, %v363
    %v365 = vrot.slane %v348, %v364
    %v370 = vmul.f32 %v346, %v353
    %v371 = vmul.f32 %v345, %v357
    %v372 = vmul.f32 %v344, %v361
    %v373 = vmul.f32 %v343, %v365
    %374 = vrot.lane.b32.xlu0 %v201, 127
    %v375 = vpop.permute.xlu0 %374
    %376 = vrot.lane.b32.xlu0 %v202, 127
    %v377 = vpop.permute.xlu0 %376
    %378 = vrot.lane.b32.xlu0 %v203, 127
    %v379 = vpop.permute.xlu0 %378
    %380 = vrot.lane.b32.xlu0 %v204, 127
    %v381 = vpop.permute.xlu0 %380
    %vm382 = vcmp.lt.s32.totalorder %v222, 127
    %v383 = vsel %vm382, %v379, %v381
    %v384 = vsel %vm382, %v377, %v379
    %v385 = vsel %vm382, %v375, %v377
    %v386 = vsel %vm382, %v381, %v375
    %s387 = scalar_lea.vmem %s7, 4
    %v388 = vld [vmem:[%s387] ss:$8 sm:$0xf]
    %v390 = vlaneseq
    %v391 = vshrl.u32 %v390, 7
    %v392 = vsub.s32 0, %v391
    %v393 = vrot.slane %v388, %v392
    %v394 = vlaneseq
    %v395 = vshrl.u32 %v394, 7
    %v396 = vsub.s32 1, %v395
    %v397 = vrot.slane %v388, %v396
    %v398 = vlaneseq
    %v399 = vshrl.u32 %v398, 7
    %v400 = vsub.s32 2, %v399
    %v401 = vrot.slane %v388, %v400
    %v402 = vlaneseq
    %v403 = vshrl.u32 %v402, 7
    %v404 = vsub.s32 3, %v403
    %v405 = vrot.slane %v388, %v404
    %v410 = vmul.f32 %v385, %v393
    %v411 = vmul.f32 %v384, %v397
    %v412 = vmul.f32 %v383, %v401
    %v413 = vmul.f32 %v386, %v405
    %414 = vrot.lane.b32.xlu0 %v201, 113
    %v415 = vpop.permute.xlu0 %414
    %416 = vrot.lane.b32.xlu0 %v202, 113
    %v417 = vpop.permute.xlu0 %416
    %418 = vrot.lane.b32.xlu0 %v203, 113
    %v419 = vpop.permute.xlu0 %418
    %420 = vrot.lane.b32.xlu0 %v204, 113
    %v421 = vpop.permute.xlu0 %420
    %vm422 = vcmp.lt.s32.totalorder %v222, 113
    %v423 = vsel %vm422, %v419, %v421
    %v424 = vsel %vm422, %v417, %v419
    %v425 = vsel %vm422, %v415, %v417
    %v426 = vsel %vm422, %v421, %v415
    %s427 = scalar_lea.vmem %s7, 5
    %v428 = vld [vmem:[%s427] ss:$8 sm:$0xf]
    %v430 = vlaneseq
    %v431 = vshrl.u32 %v430, 7
    %v432 = vsub.s32 0, %v431
    %v433 = vrot.slane %v428, %v432
    %v434 = vlaneseq
    %v435 = vshrl.u32 %v434, 7
    %v436 = vsub.s32 1, %v435
    %v437 = vrot.slane %v428, %v436
    %v438 = vlaneseq
    %v439 = vshrl.u32 %v438, 7
    %v440 = vsub.s32 2, %v439
    %v441 = vrot.slane %v428, %v440
    %v442 = vlaneseq
    %v443 = vshrl.u32 %v442, 7
    %v444 = vsub.s32 3, %v443
    %v445 = vrot.slane %v428, %v444
    %v450 = vmul.f32 %v425, %v433
    %v451 = vmul.f32 %v424, %v437
    %v452 = vmul.f32 %v423, %v441
    %v453 = vmul.f32 %v426, %v445
    %454 = vrot.lane.b32.xlu0 %v201, 112
    %v455 = vpop.permute.xlu0 %454
    %456 = vrot.lane.b32.xlu0 %v202, 112
    %v457 = vpop.permute.xlu0 %456
    %458 = vrot.lane.b32.xlu0 %v203, 112
    %v459 = vpop.permute.xlu0 %458
    %460 = vrot.lane.b32.xlu0 %v204, 112
    %v461 = vpop.permute.xlu0 %460
    %vm462 = vcmp.lt.s32.totalorder %v222, 112
    %v463 = vsel %vm462, %v459, %v461
    %v464 = vsel %vm462, %v457, %v459
    %v465 = vsel %vm462, %v455, %v457
    %v466 = vsel %vm462, %v461, %v455
    %s467 = scalar_lea.vmem %s7, 6
    %v468 = vld [vmem:[%s467] ss:$8 sm:$0xf]
    %v470 = vlaneseq
    %v471 = vshrl.u32 %v470, 7
    %v472 = vsub.s32 0, %v471
    %v473 = vrot.slane %v468, %v472
    %v474 = vlaneseq
    %v475 = vshrl.u32 %v474, 7
    %v476 = vsub.s32 1, %v475
    %v477 = vrot.slane %v468, %v476
    %v478 = vlaneseq
    %v479 = vshrl.u32 %v478, 7
    %v480 = vsub.s32 2, %v479
    %v481 = vrot.slane %v468, %v480
    %v482 = vlaneseq
    %v483 = vshrl.u32 %v482, 7
    %v484 = vsub.s32 3, %v483
    %v485 = vrot.slane %v468, %v484
    %v490 = vmul.f32 %v465, %v473
    %v491 = vmul.f32 %v464, %v477
    %v492 = vmul.f32 %v463, %v481
    %v493 = vmul.f32 %v466, %v485
    %494 = vrot.lane.b32.xlu0 %v201, 111
    %v495 = vpop.permute.xlu0 %494
    %496 = vrot.lane.b32.xlu0 %v202, 111
    %v497 = vpop.permute.xlu0 %496
    %498 = vrot.lane.b32.xlu0 %v203, 111
    %v499 = vpop.permute.xlu0 %498
    %500 = vrot.lane.b32.xlu0 %v204, 111
    %v501 = vpop.permute.xlu0 %500
    %vm502 = vcmp.lt.s32.totalorder %v222, 111
    %v503 = vsel %vm502, %v499, %v501
    %v504 = vsel %vm502, %v497, %v499
    %v505 = vsel %vm502, %v495, %v497
    %v506 = vsel %vm502, %v501, %v495
    %s507 = scalar_lea.vmem %s7, 7
    %v508 = vld [vmem:[%s507] ss:$8 sm:$0xf]
    %v510 = vlaneseq
    %v511 = vshrl.u32 %v510, 7
    %v512 = vsub.s32 0, %v511
    %v513 = vrot.slane %v508, %v512
    %v514 = vlaneseq
    %v515 = vshrl.u32 %v514, 7
    %v516 = vsub.s32 1, %v515
    %v517 = vrot.slane %v508, %v516
    %v518 = vlaneseq
    %v519 = vshrl.u32 %v518, 7
    %v520 = vsub.s32 2, %v519
    %v521 = vrot.slane %v508, %v520
    %v522 = vlaneseq
    %v523 = vshrl.u32 %v522, 7
    %v524 = vsub.s32 3, %v523
    %v525 = vrot.slane %v508, %v524
    %v530 = vmul.f32 %v505, %v513
    %v531 = vmul.f32 %v504, %v517
    %v532 = vmul.f32 %v503, %v521
    %v533 = vmul.f32 %v506, %v525
    %v534 = vpack.c.bf16 %v290, %v250
    %v535 = vpack.c.bf16 %v291, %v251
    %v536 = vpack.c.bf16 %v292, %v252
    %v537 = vpack.c.bf16 %v293, %v253
    %v538 = vpack.c.bf16 %v370, %v330
    %v539 = vpack.c.bf16 %v371, %v331
    %v540 = vpack.c.bf16 %v372, %v332
    %v541 = vpack.c.bf16 %v373, %v333
    %v542 = vpack.c.bf16 %v410, %v201
    %v543 = vpack.c.bf16 %v411, %v202
    %v544 = vpack.c.bf16 %v412, %v203
    %v545 = vpack.c.bf16 %v413, %v204
    %v546 = vpack.c.bf16 %v490, %v450
    %v547 = vpack.c.bf16 %v491, %v451
    %v548 = vpack.c.bf16 %v492, %v452
    %v549 = vpack.c.bf16 %v493, %v453
    %v550 = vpack.c.bf16 %v530, %v530
    %v551 = vpack.c.bf16 %v531, %v531
    %v552 = vpack.c.bf16 %v532, %v532
    %v553 = vpack.c.bf16 %v533, %v533
    %v554 = vld [vmem:[%s3] sm:$0xf]
    %v555 = vld [vmem:[%s4] sm:$0xff]
    %557 = vset.pattern.permute.xlu0 0
    %558 = vperm.xlu0 %557, %v555
    %v559 = vpop.permute.xlu0 %558
    %vm561 = vcmask 588800
    %v563 = vsel %vm561, %v554, 0
    %vm565 = vcmask 1043456
    %v567 = vsel %vm565, %v550, 0
    %v570 = vsel %vm565, %v551, 0
    %v573 = vsel %vm565, %v552, 0
    %v576 = vsel %vm565, %v553, 0
    %578 = vmatprep.subr.bf16.mxu0 0
    %579 = vmatpush1.bf16.msra.mxu0 0
    %580 = vmatprep.subr.bf16.mxu0 0
    %581 = vmatpush1.bf16.msra.mxu0 0
    %582 = vmatprep.subr.bf16.mxu0 0
    %583 = vmatpush1.bf16.msra.mxu0 0
    %584 = vmatprep.subr.bf16.mxu0 %v570
    %585 = vmatpush1.bf16.msra.mxu0 %v567
    %586 = vmatprep.subr.bf16.mxu0 %v547
    %587 = vmatpush1.bf16.msra.mxu0 %v546
    %588 = vmatprep.subr.bf16.mxu0 %v543
    %589 = vmatpush1.bf16.msra.mxu0 %v542
    %590 = vmatprep.subr.bf16.mxu0 %v539
    %591 = vmatpush1.bf16.msra.mxu0 %v538
    %592 = vmatprep.subr.bf16.mxu0 %v535
    %593 = vmatpush1.bf16.msra.mxu0 %v534
    %594 = vmatprep.subr.bf16.mxu0 0
    %595 = vmatpush2.bf16.msra.mxu0 0
    %596 = vmatprep.subr.bf16.mxu0 0
    %597 = vmatpush2.bf16.msra.mxu0 0
    %598 = vmatprep.subr.bf16.mxu0 0
    %599 = vmatpush2.bf16.msra.mxu0 0
    %600 = vmatprep.subr.bf16.mxu0 0
    %601 = vmatpush2.bf16.msra.mxu0 0
    %602 = vmatprep.subr.bf16.mxu0 0
    %603 = vmatpush2.bf16.msra.mxu0 0
    %604 = vmatprep.subr.bf16.mxu0 0
    %605 = vmatpush2.bf16.msra.mxu0 0
    %606 = vmatprep.subr.bf16.mxu0 0
    %607 = vmatpush2.bf16.msra.mxu0 0
    %608 = vmatprep.subr.bf16.mxu0 0
    %609 = vmatpush2.bf16.msra.mxu0 0
    %610 = vmatprep.mubr.bf16.mxu0 0
    %611 = vmatmul.mubr.bf16.gmra.mxu0 %v563
    %v612 = vpop.f32.mrf.mxu0
    %v613 = vadd.f32 %v559, %v612
    %v614 = vpop.f32.mrf.mxu0
    %v615 = vadd.f32 %v559, %v614
    %v616 = vpop.f32.mrf.mxu0
    %v617 = vpop.f32.mrf.mxu0
    %618 = vdwg.mxu0
    %619 = vmatprep.subr.bf16.mxu0 0
    %620 = vmatpush1.bf16.msra.mxu0 0
    %621 = vmatprep.subr.bf16.mxu0 0
    %622 = vmatpush1.bf16.msra.mxu0 0
    %623 = vmatprep.subr.bf16.mxu0 0
    %624 = vmatpush1.bf16.msra.mxu0 0
    %625 = vmatprep.subr.bf16.mxu0 %v576
    %626 = vmatpush1.bf16.msra.mxu0 %v573
    %627 = vmatprep.subr.bf16.mxu0 %v549
    %628 = vmatpush1.bf16.msra.mxu0 %v548
    %629 = vmatprep.subr.bf16.mxu0 %v545
    %630 = vmatpush1.bf16.msra.mxu0 %v544
    %631 = vmatprep.subr.bf16.mxu0 %v541
    %632 = vmatpush1.bf16.msra.mxu0 %v540
    %633 = vmatprep.subr.bf16.mxu0 %v537
    %634 = vmatpush1.bf16.msra.mxu0 %v536
    %635 = vmatprep.subr.bf16.mxu0 0
    %636 = vmatpush2.bf16.msra.mxu0 0
    %637 = vmatprep.subr.bf16.mxu0 0
    %638 = vmatpush2.bf16.msra.mxu0 0
    %639 = vmatprep.subr.bf16.mxu0 0
    %640 = vmatpush2.bf16.msra.mxu0 0
    %641 = vmatprep.subr.bf16.mxu0 0
    %642 = vmatpush2.bf16.msra.mxu0 0
    %643 = vmatprep.subr.bf16.mxu0 0
    %644 = vmatpush2.bf16.msra.mxu0 0
    %645 = vmatprep.subr.bf16.mxu0 0
    %646 = vmatpush2.bf16.msra.mxu0 0
    %647 = vmatprep.subr.bf16.mxu0 0
    %648 = vmatpush2.bf16.msra.mxu0 0
    %649 = vmatprep.subr.bf16.mxu0 0
    %650 = vmatpush2.bf16.msra.mxu0 0
    %651 = vmatprep.mubr.bf16.mxu0 0
    %652 = vmatmul.mubr.bf16.gmra.mxu0 %v563
    %v653 = vpop.f32.mrf.mxu0
    %v654 = vadd.f32 %v559, %v653
    %v655 = vpop.f32.mrf.mxu0
    %v656 = vadd.f32 %v559, %v655
    %v657 = vpop.f32.mrf.mxu0
    %v658 = vpop.f32.mrf.mxu0
    %659 = vdwg.mxu0
    %v660 = vmax.f32 %v613, 0.0
    %v661 = vmax.f32 %v615, 0.0
    %v662 = vmax.f32 %v654, 0.0
    %v663 = vmax.f32 %v656, 0.0
    %v664 = vld [vmem:[%s5] sm:$0xf]
    %v665 = vld [vmem:[%s5 + $0x4] sm:$0xf]
    %v666 = vpack.c.bf16 %v660, %v660
    %v667 = vpack.c.bf16 %v661, %v661
    %v668 = vpack.c.bf16 %v662, %v662
    %v669 = vpack.c.bf16 %v663, %v663
    %v670 = vld [vmem:[%s6] sm:$0xff]
    %v671 = vld [vmem:[%s6 + $0x8] sm:$0xff]
    %673 = vset.pattern.permute.xlu0 0
    %674 = vperm.xlu0 %673, %v670
    %v675 = vpop.permute.xlu0 %674
    %678 = vset.pattern.permute.xlu0 0
    %679 = vperm.xlu0 %678, %v671
    %v680 = vpop.permute.xlu0 %679
    %v684 = vunpack.c.l.b16 %v664
    %v685 = vunpack.c.l.b16 %v665
    %v686 = vpack.c.b16 %v685, %v684
    %vm687 = vcmask 64512
    %v689 = vsel %vm687, %v686, 0
    %v692 = vsel %vm565, %v666, 0
    %v695 = vsel %vm565, %v667, 0
    %v698 = vsel %vm565, %v668, 0
    %v701 = vsel %vm565, %v669, 0
    %703 = vmatprep.subr.bf16.mxu0 0
    %704 = vmatpush1.bf16.msra.mxu0 0
    %705 = vmatprep.subr.bf16.mxu0 0
    %706 = vmatpush1.bf16.msra.mxu0 0
    %707 = vmatprep.subr.bf16.mxu0 0
    %708 = vmatpush1.bf16.msra.mxu0 0
    %709 = vmatprep.subr.bf16.mxu0 0
    %710 = vmatpush1.bf16.msra.mxu0 0
    %711 = vmatprep.subr.bf16.mxu0 0
    %712 = vmatpush1.bf16.msra.mxu0 0
    %713 = vmatprep.subr.bf16.mxu0 0
    %714 = vmatpush1.bf16.msra.mxu0 0
    %715 = vmatprep.subr.bf16.mxu0 0
    %716 = vmatpush1.bf16.msra.mxu0 0
    %717 = vmatprep.subr.bf16.mxu0 %v695
    %718 = vmatpush1.bf16.msra.mxu0 %v692
    %719 = vmatprep.subr.bf16.mxu0 0
    %720 = vmatpush2.bf16.msra.mxu0 0
    %721 = vmatprep.subr.bf16.mxu0 0
    %722 = vmatpush2.bf16.msra.mxu0 0
    %723 = vmatprep.subr.bf16.mxu0 0
    %724 = vmatpush2.bf16.msra.mxu0 0
    %725 = vmatprep.subr.bf16.mxu0 0
    %726 = vmatpush2.bf16.msra.mxu0 0
    %727 = vmatprep.subr.bf16.mxu0 0
    %728 = vmatpush2.bf16.msra.mxu0 0
    %729 = vmatprep.subr.bf16.mxu0 0
    %730 = vmatpush2.bf16.msra.mxu0 0
    %731 = vmatprep.subr.bf16.mxu0 0
    %732 = vmatpush2.bf16.msra.mxu0 0
    %733 = vmatprep.subr.bf16.mxu0 0
    %734 = vmatpush2.bf16.msra.mxu0 0
    %735 = vmatprep.mubr.bf16.mxu0 0
    %736 = vmatmul.mubr.bf16.gmra.mxu0 %v689
    %v737 = vpop.f32.mrf.mxu0
    %v738 = vadd.f32 %v675, %v737
    %v739 = vpop.f32.mrf.mxu0
    %v740 = vadd.f32 %v675, %v739
    %v741 = vpop.f32.mrf.mxu0
    %v742 = vadd.f32 %v680, %v741
    %v743 = vpop.f32.mrf.mxu0
    %v744 = vadd.f32 %v680, %v743
    %745 = vdwg.mxu0
    %746 = vmatprep.subr.bf16.mxu0 0
    %747 = vmatpush1.bf16.msra.mxu0 0
    %748 = vmatprep.subr.bf16.mxu0 0
    %749 = vmatpush1.bf16.msra.mxu0 0
    %750 = vmatprep.subr.bf16.mxu0 0
    %751 = vmatpush1.bf16.msra.mxu0 0
    %752 = vmatprep.subr.bf16.mxu0 0
    %753 = vmatpush1.bf16.msra.mxu0 0
    %754 = vmatprep.subr.bf16.mxu0 0
    %755 = vmatpush1.bf16.msra.mxu0 0
    %756 = vmatprep.subr.bf16.mxu0 0
    %757 = vmatpush1.bf16.msra.mxu0 0
    %758 = vmatprep.subr.bf16.mxu0 0
    %759 = vmatpush1.bf16.msra.mxu0 0
    %760 = vmatprep.subr.bf16.mxu0 %v701
    %761 = vmatpush1.bf16.msra.mxu0 %v698
    %762 = vmatprep.subr.bf16.mxu0 0
    %763 = vmatpush2.bf16.msra.mxu0 0
    %764 = vmatprep.subr.bf16.mxu0 0
    %765 = vmatpush2.bf16.msra.mxu0 0
    %766 = vmatprep.subr.bf16.mxu0 0
    %767 = vmatpush2.bf16.msra.mxu0 0
    %768 = vmatprep.subr.bf16.mxu0 0
    %769 = vmatpush2.bf16.msra.mxu0 0
    %770 = vmatprep.subr.bf16.mxu0 0
    %771 = vmatpush2.bf16.msra.mxu0 0
    %772 = vmatprep.subr.bf16.mxu0 0
    %773 = vmatpush2.bf16.msra.mxu0 0
    %774 = vmatprep.subr.bf16.mxu0 0
    %775 = vmatpush2.bf16.msra.mxu0 0
    %776 = vmatprep.subr.bf16.mxu0 0
    %777 = vmatpush2.bf16.msra.mxu0 0
    %778 = vmatprep.mubr.bf16.mxu0 0
    %779 = vmatmul.mubr.bf16.gmra.mxu0 %v689
    %v780 = vpop.f32.mrf.mxu0
    %v781 = vadd.f32 %v675, %v780
    %v782 = vpop.f32.mrf.mxu0
    %v783 = vadd.f32 %v675, %v782
    %v784 = vpop.f32.mrf.mxu0
    %v785 = vadd.f32 %v680, %v784
    %v786 = vpop.f32.mrf.mxu0
    %v787 = vadd.f32 %v680, %v786
    %788 = vdwg.mxu0
    %v789 = vmax.f32 %v738, 0.0
    %v790 = vmax.f32 %v740, 0.0
    %v791 = vmax.f32 %v781, 0.0
    %v792 = vmax.f32 %v783, 0.0
    %v793 = vmax.f32 %v742, 0.0
    %v794 = vmax.f32 %v744, 0.0
    %v795 = vmax.f32 %v785, 0.0
    %v796 = vmax.f32 %v787, 0.0
    %v797 = vadd.f32 %v789, %v205
    %v798 = vadd.f32 %v790, %v206
    %v799 = vadd.f32 %v791, %v207
    %v800 = vadd.f32 %v792, %v208
    %v801 = vadd.f32 %v793, %v209
    %v802 = vadd.f32 %v794, %v210
    %v803 = vadd.f32 %v795, %v211
    %v804 = vadd.f32 %v796, %v212
    %v805 = vpack.c.bf16 %v801, %v797
    %v806 = vpack.c.bf16 %v802, %v798
    %v807 = vpack.c.bf16 %v803, %v799
    %v808 = vpack.c.bf16 %v804, %v800
    %v813 = vunpack.c.l.b16 %v805
    %v814 = vunpack.c.l.b16 %v806
    %v815 = vunpack.c.l.b16 %v807
    %v816 = vunpack.c.l.b16 %v808
    %v817 = vunpack.c.h.b16 %v805
    %v818 = vunpack.c.h.b16 %v806
    %v819 = vunpack.c.h.b16 %v807
    %v820 = vunpack.c.h.b16 %v808
    %v821 = vpack.c.b16 %v814, %v813
    %v822 = vpack.c.b16 %v816, %v815
    %v823 = vpack.c.b16 %v818, %v817
    %v824 = vpack.c.b16 %v820, %v819
    %829 = vst [vmem:[#allocation2] sm:$0xff] %v821
    %830 = vst [vmem:[#allocation2 + $0x8] sm:$0xff] %v822
    %831 = vst [vmem:[#allocation2 + $0x10] sm:$0xff] %v823
    %832 = vst [vmem:[#allocation2 + $0x18] sm:$0xff] %v824
    // Predicated region
    $region34: #{tpu_custom_call.1} parent=1 // pred_check
      _
    $region35: #{tpu_custom_call.1} parent=1 // pred_check_branch
      %834 = sbr.rel (0) target = $region37
    $region36: #{tpu_custom_call.1} parent=1 // pred_region
      %s836 = ssub.s32 512, 512
      %837 = vsyncadd [#allocation3], %s836
      %s838 = sshll.u32 [#allocation2], 4
      %s839 = int_to_ptr.vmem [resolvable:$true] %s838
      %844 = dma.vmem_to_hbm [thread:$0]  %s839, 512, %s8, [#allocation3], 256, 256, 16
    $region37: #{tpu_custom_call.1} parent=1 // pred_fallthru
      _
    // Predicated region
    $region38: #{tpu_custom_call.1} parent=1 // pred_check
      _
    $region39: #{tpu_custom_call.1} parent=1 // pred_check_branch
      %846 = sbr.rel (0) target = $region41
    $region40: #{tpu_custom_call.1} parent=1 // pred_region
      %847 = dma.done [#allocation3], 512
    $region41: #{tpu_custom_call.1} parent=1 // pred_fallthru
      _
    %848 = vsyncpa [#allocation3], 1

</llo_original>
